<compile_context>
chip_gen: v6e
topology: v6e:2x2x1
jax: 0.10.0
libtpu: 0.0.40
codegen_flags: <defaults>
</compile_context>

<pallas_src>
import functools

import jax
import jax.numpy as jnp
from jax.experimental import pallas as pl
from jax.experimental.pallas import tpu as pltpu

LANE = 128


def _pad_axis(a, axis, multiple):
    size = a.shape[axis]
    pad = (-size) % multiple
    if pad == 0:
        return a
    widths = [(0, 0)] * a.ndim
    widths[axis] = (0, pad)
    return jnp.pad(a, widths)


def gcn_layer_kernel(adj_ref, x_ref, dout_ref, din_ref, w_ref, b_ref,
                     o_ref, acc_ref, *, apply_relu, aggregate_first):
    k = pl.program_id(1)

    @pl.when(k == 0)
    def _init():
        acc_ref[...] = jnp.zeros_like(acc_ref)

    # Source-side features of this adjacency-column tile, scaled by the
    # DGL norm='both' source normalization D_out^{-1/2}.
    if aggregate_first:
        msg = x_ref[...].astype(jnp.float32) * dout_ref[...]
    else:
        msg = jnp.dot(x_ref[...], w_ref[...],
                      preferred_element_type=jnp.float32) * dout_ref[...]

    # Weighted-message aggregation on the MXU (bf16 operands, f32 accumulate).
    acc_ref[...] += jnp.dot(adj_ref[...], msg.astype(jnp.bfloat16),
                            preferred_element_type=jnp.float32)

    @pl.when(k == pl.num_programs(1) - 1)
    def _finalize():
        acc = acc_ref[...]
        if aggregate_first:
            # Feature transform after aggregation (narrow channel dim first).
            acc = jnp.dot(acc, w_ref[...].astype(jnp.float32),
                          preferred_element_type=jnp.float32)
        out = acc * din_ref[...] + b_ref[...]
        if apply_relu:
            out = jnp.maximum(out, 0.0)
        o_ref[...] = out.astype(o_ref.dtype)


def gcn_layer(adj_bf16, x_bf16, d_out, d_in, w_bf16, b, *, apply_relu,
              out_dtype=jnp.float32, block_m=512, block_k=512):
    """One GraphConv layer (norm folded in, bias [+ ReLU]) as a tiled pallas_call."""
    N = adj_bf16.shape[0]
    c_in = x_bf16.shape[1]
    c_out = w_bf16.shape[1]

    # Tile sizes: fall back to the full extent if it does not divide evenly
    # (keeps the (8,128) block constraints satisfied for any N).
    tm = block_m if (N % block_m == 0) else N
    tk = block_k if (N % block_k == 0) else N

    aggregate_first = c_in <= c_out
    c_acc = c_in if aggregate_first else c_out

    kernel = functools.partial(gcn_layer_kernel, apply_relu=apply_relu,
                               aggregate_first=aggregate_first)

    return pl.pallas_call(
        kernel,
        out_shape=jax.ShapeDtypeStruct((N, c_out), out_dtype),
        grid_spec=pltpu.PrefetchScalarGridSpec(
            num_scalar_prefetch=0,
            grid=(N // tm, N // tk),
            in_specs=[
                pl.BlockSpec((tm, tk), lambda i, k: (i, k)),       # adj tile (streamed)
                pl.BlockSpec((tk, c_in), lambda i, k: (k, 0)),     # source features
                pl.BlockSpec((tk, 1), lambda i, k: (k, 0)),        # D_out^{-1/2}
                pl.BlockSpec((tm, 1), lambda i, k: (i, 0)),        # D_in^{-1/2}
                pl.BlockSpec((c_in, c_out), lambda i, k: (0, 0)),  # W (resident)
                pl.BlockSpec((1, c_out), lambda i, k: (0, 0)),     # bias
            ],
            out_specs=pl.BlockSpec((tm, c_out), lambda i, k: (i, 0)),
            scratch_shapes=[pltpu.VMEM((tm, c_acc), jnp.float32)],
        ),
        compiler_params=pltpu.CompilerParams(
            dimension_semantics=("parallel", "arbitrary"),
            vmem_limit_bytes=32 * 1024 * 1024,
        ),
    )(adj_bf16, x_bf16, d_out, d_in, w_bf16, b)


def gcn_dgl_forward(x, adj, weights, biases, activation_last=None,
                    block_m=512, block_k=512):
    """GCN_dgl.forward in eval mode (dropout / dropout_adj identity, bn=False)."""
    # DGL GraphConv norm='both': normalize by *structural* degree counts;
    # edge weights only scale messages. Zero-degree rows -> zeros.
    deg_in = jnp.sum((adj != 0).astype(jnp.float32), axis=1)
    deg_out = jnp.sum((adj != 0).astype(jnp.float32), axis=0)
    d_in = jnp.where(deg_in > 0, jax.lax.rsqrt(deg_in), 0.0)[:, None]
    d_out = jnp.where(deg_out > 0, jax.lax.rsqrt(deg_out), 0.0)[:, None]

    adj_bf16 = adj.astype(jnp.bfloat16)  # bandwidth-dominant stream in bf16
    h = _pad_axis(x, 1, LANE).astype(jnp.bfloat16)

    n_layers = len(weights)
    for idx, (w, b) in enumerate(zip(weights, biases)):
        last = idx == n_layers - 1
        w_p = _pad_axis(_pad_axis(w, 0, LANE), 1, LANE).astype(jnp.bfloat16)
        b_p = _pad_axis(b, 1, LANE).astype(jnp.float32)
        h = gcn_layer(adj_bf16, h, d_out, d_in, w_p, b_p,
                      apply_relu=not last,
                      out_dtype=jnp.float32 if last else jnp.bfloat16,
                      block_m=block_m, block_k=block_k)
        # F.dropout(training=False) -> identity; bn=False by default.

    out_channels = weights[-1].shape[1]
    h = h[:, :out_channels]
    if activation_last == "log_softmax":
        h = jax.nn.log_softmax(h, axis=1)
    elif activation_last == "relu":
        h = jnp.maximum(h, 0.0)
    return h


def xavier_uniform(key, fan_in, fan_out):
    limit = (6.0 / (fan_in + fan_out)) ** 0.5
    return jax.random.uniform(key, (fan_in, fan_out), jnp.float32, -limit, limit)


if __name__ == "__main__":
    # Small config: num_layers=2 -> [GraphConv(in,hidden), GraphConv(hidden,out)]
    N = 256
    in_channels = 16
    hidden_channels = 32
    out_channels = 8

    key = jax.random.PRNGKey(0)
    k_x, k_adj, k_w0, k_w1 = jax.random.split(key, 4)

    # Node features.
    x = jax.random.normal(k_x, (N, in_channels), jnp.float32)

    # Random sparse-ish symmetric weighted adjacency with self-loops.
    a = jax.random.uniform(k_adj, (N, N), jnp.float32)
    adj = jnp.where(a > 0.9, a, 0.0)
    adj = 0.5 * (adj + adj.T) + jnp.eye(N, dtype=jnp.float32)

    # Deterministic parameter init (DGL GraphConv: xavier_uniform weight, zero bias).
    weights = [
        xavier_uniform(k_w0, in_channels, hidden_channels),
        xavier_uniform(k_w1, hidden_channels, out_channels),
    ]
    biases = [
        jnp.zeros((1, hidden_channels), jnp.float32),
        jnp.zeros((1, out_channels), jnp.float32),
    ]

    # Small block sizes so the test actually exercises the (row, reduction)
    # tiling + accumulator pipeline (grid = (2, 2) at N=256).
    out = gcn_dgl_forward(x, adj, weights, biases, activation_last=None,
                          block_m=128, block_k=128)
    out = jax.block_until_ready(out)
    assert out.shape == (N, out_channels)

    # Pure-JAX f32 reference of the same forward (bf16 tolerance).
    deg_in = jnp.sum((adj != 0).astype(jnp.float32), axis=1)
    deg_out = jnp.sum((adj != 0).astype(jnp.float32), axis=0)
    d_in = jnp.where(deg_in > 0, jax.lax.rsqrt(deg_in), 0.0)[:, None]
    d_out = jnp.where(deg_out > 0, jax.lax.rsqrt(deg_out), 0.0)[:, None]

    def ref_layer(h, w, b, relu):
        r = (adj @ ((h * d_out) @ w)) * d_in + b
        return jnp.maximum(r, 0.0) if relu else r

    ref = ref_layer(x, weights[0], biases[0], True)
    ref = ref_layer(ref, weights[1], biases[1], False)

    max_err = float(jnp.max(jnp.abs(out - ref)))
    assert max_err < 0.05, f"max abs err {max_err}"
    print("KERNEL_OK")
</pallas_src>

<mosaic_0001>
module attributes {stable_mosaic.version = 11 : i64} {
  func.func @gcn_layer_kernel(%arg0: i32, %arg1: i32, %arg2: memref<128x128xbf16, #tpu.memory_space<vmem>>, %arg3: memref<128x128xbf16, #tpu.memory_space<vmem>>, %arg4: memref<128x1xf32, #tpu.memory_space<vmem>>, %arg5: memref<128x1xf32, #tpu.memory_space<vmem>>, %arg6: memref<128x128xbf16, #tpu.memory_space<vmem>>, %arg7: memref<1x128xf32, #tpu.memory_space<vmem>>, %arg8: memref<128x128xbf16, #tpu.memory_space<vmem>>, %arg9: memref<128x128xf32, #tpu.memory_space<vmem>>) attributes {dimension_semantics = [#tpu.dimension_semantics<parallel>, #tpu.dimension_semantics<arbitrary>], iteration_bounds = array<i64: 2, 2>, scalar_prefetch = 0 : i64, scratch_operands = 1 : i64, tpu.core_type = #tpu.core_type<tc>, window_params = [{transform_indices = @transform_0, window_bounds = array<i64: 128, 128>}, {transform_indices = @transform_1, window_bounds = array<i64: 128, 128>}, {transform_indices = @transform_2, window_bounds = array<i64: 128, 1>}, {transform_indices = @transform_3, window_bounds = array<i64: 128, 1>}, {pipeline_mode = #tpu.pipeline_mode<synchronous>, transform_indices = @transform_4, window_bounds = array<i64: 128, 128>}, {pipeline_mode = #tpu.pipeline_mode<synchronous>, transform_indices = @transform_5, window_bounds = array<i64: 1, 128>}, {transform_indices = @transform_6, window_bounds = array<i64: 128, 128>}]} {
    %c0_i32 = arith.constant 0 : i32
    %0 = arith.cmpi eq, %arg1, %c0_i32 : i32
    %1 = arith.extui %0 : i1 to i32
    %c0_i32_0 = arith.constant 0 : i32
    %2 = arith.cmpi ne, %1, %c0_i32_0 : i32
    scf.if %2 {
      %cst_11 = arith.constant 0.000000e+00 : f32
      %17 = vector.broadcast %cst_11 : f32 to vector<128x128xf32>
      %c0_12 = arith.constant 0 : index
      %c0_13 = arith.constant 0 : index
      %18 = vector.load %arg9[%c0_12, %c0_13] : memref<128x128xf32, #tpu.memory_space<vmem>>, vector<128x128xf32>
      tpu.vector_store %arg9[%c0_12, %c0_13], %17 {strides = array<i32>} : memref<128x128xf32, #tpu.memory_space<vmem>>, vector<128x128xf32>,
    } else {
    }
    %c0 = arith.constant 0 : index
    %c0_1 = arith.constant 0 : index
    %3 = vector.load %arg3[%c0, %c0_1] : memref<128x128xbf16, #tpu.memory_space<vmem>>, vector<128x128xbf16>
    %4 = arith.extf %3 : vector<128x128xbf16> to vector<128x128xf32>
    %c0_2 = arith.constant 0 : index
    %c0_3 = arith.constant 0 : index
    %5 = vector.load %arg4[%c0_2, %c0_3] : memref<128x1xf32, #tpu.memory_space<vmem>>, vector<128x1xf32>
    %6 = vector.broadcast %5 : vector<128x1xf32> to vector<128x128xf32>
    %7 = arith.mulf %4, %6 : vector<128x128xf32>
    %c0_4 = arith.constant 0 : index
    %c0_5 = arith.constant 0 : index
    %8 = vector.load %arg9[%c0_4, %c0_5] : memref<128x128xf32, #tpu.memory_space<vmem>>, vector<128x128xf32>
    %c0_6 = arith.constant 0 : index
    %c0_7 = arith.constant 0 : index
    %9 = vector.load %arg2[%c0_6, %c0_7] : memref<128x128xbf16, #tpu.memory_space<vmem>>, vector<128x128xbf16>
    %10 = arith.truncf %7 : vector<128x128xf32> to vector<128x128xbf16>
    %cst = arith.constant dense<0.000000e+00> : vector<128x128xf32>
    %11 = tpu.matmul %9, %10, %cst {dimension_numbers = #tpu.dot_dimension_numbers<[1], [0], [0], [1], [0, 0, 1, 1], [], []>} : vector<128x128xbf16>, vector<128x128xbf16>, vector<128x128xf32> -> vector<128x128xf32>
    %12 = arith.addf %8, %11 : vector<128x128xf32>
    %c0_8 = arith.constant 0 : index
    %c0_9 = arith.constant 0 : index
    %13 = vector.load %arg9[%c0_8, %c0_9] : memref<128x128xf32, #tpu.memory_space<vmem>>, vector<128x128xf32>
    tpu.vector_store %arg9[%c0_8, %c0_9], %12 {strides = array<i32>} : memref<128x128xf32, #tpu.memory_space<vmem>>, vector<128x128xf32>,
    %c1_i32 = arith.constant 1 : i32
    %14 = arith.cmpi eq, %arg1, %c1_i32 : i32
    %15 = arith.extui %14 : i1 to i32
    %c0_i32_10 = arith.constant 0 : i32
    %16 = arith.cmpi ne, %15, %c0_i32_10 : i32
    scf.if %16 {
      %c0_11 = arith.constant 0 : index
      %c0_12 = arith.constant 0 : index
      %17 = vector.load %arg9[%c0_11, %c0_12] : memref<128x128xf32, #tpu.memory_space<vmem>>, vector<128x128xf32>
      %c0_13 = arith.constant 0 : index
      %c0_14 = arith.constant 0 : index
      %18 = vector.load %arg6[%c0_13, %c0_14] : memref<128x128xbf16, #tpu.memory_space<vmem>>, vector<128x128xbf16>
      %19 = arith.extf %18 : vector<128x128xbf16> to vector<128x128xf32>
      %cst_15 = arith.constant dense<0.000000e+00> : vector<128x128xf32>
      %20 = tpu.matmul %17, %19, %cst_15 {dimension_numbers = #tpu.dot_dimension_numbers<[1], [0], [0], [1], [0, 0, 1, 1], [], []>} : vector<128x128xf32>, vector<128x128xf32>, vector<128x128xf32> -> vector<128x128xf32>
      %c0_16 = arith.constant 0 : index
      %c0_17 = arith.constant 0 : index
      %21 = vector.load %arg5[%c0_16, %c0_17] : memref<128x1xf32, #tpu.memory_space<vmem>>, vector<128x1xf32>
      %22 = vector.broadcast %21 : vector<128x1xf32> to vector<128x128xf32>
      %23 = arith.mulf %20, %22 : vector<128x128xf32>
      %c0_18 = arith.constant 0 : index
      %c0_19 = arith.constant 0 : index
      %24 = vector.load %arg7[%c0_18, %c0_19] : memref<1x128xf32, #tpu.memory_space<vmem>>, vector<1x128xf32>
      %25 = vector.broadcast %24 : vector<1x128xf32> to vector<128x128xf32>
      %26 = arith.addf %23, %25 : vector<128x128xf32>
      %cst_20 = arith.constant 0.000000e+00 : f32
      %27 = vector.broadcast %cst_20 : f32 to vector<128x128xf32>
      %28 = arith.maximumf %26, %27 : vector<128x128xf32>
      %29 = arith.truncf %28 : vector<128x128xf32> to vector<128x128xbf16>
      %c0_21 = arith.constant 0 : index
      %c0_22 = arith.constant 0 : index
      %30 = vector.load %arg8[%c0_21, %c0_22] : memref<128x128xbf16, #tpu.memory_space<vmem>>, vector<128x128xbf16>
      tpu.vector_store %arg8[%c0_21, %c0_22], %29 {strides = array<i32>} : memref<128x128xbf16, #tpu.memory_space<vmem>>, vector<128x128xbf16>,
    } else {
    }
    return
  }
  func.func @transform_0(%arg0: i32, %arg1: i32) -> (i32, i32) {
    %c0_i32 = arith.constant 0 : i32
    return %arg0, %arg1 : i32, i32
  }
  func.func @transform_1(%arg0: i32, %arg1: i32) -> (i32, i32) {
    %c0_i32 = arith.constant 0 : i32
    %c0_i32_0 = arith.constant 0 : i32
    return %arg1, %c0_i32 : i32, i32
  }
  func.func @transform_2(%arg0: i32, %arg1: i32) -> (i32, i32) {
    %c0_i32 = arith.constant 0 : i32
    %c0_i32_0 = arith.constant 0 : i32
    return %arg1, %c0_i32 : i32, i32
  }
  func.func @transform_3(%arg0: i32, %arg1: i32) -> (i32, i32) {
    %c0_i32 = arith.constant 0 : i32
    %c0_i32_0 = arith.constant 0 : i32
    return %arg0, %c0_i32 : i32, i32
  }
  func.func @transform_4(%arg0: i32, %arg1: i32) -> (i32, i32) {
    %c0_i32 = arith.constant 0 : i32
    %c0_i32_0 = arith.constant 0 : i32
    %c0_i32_1 = arith.constant 0 : i32
    return %c0_i32, %c0_i32_0 : i32, i32
  }
  func.func @transform_5(%arg0: i32, %arg1: i32) -> (i32, i32) {
    %c0_i32 = arith.constant 0 : i32
    %c0_i32_0 = arith.constant 0 : i32
    %c0_i32_1 = arith.constant 0 : i32
    return %c0_i32, %c0_i32_0 : i32, i32
  }
  func.func @transform_6(%arg0: i32, %arg1: i32) -> (i32, i32) {
    %c0_i32 = arith.constant 0 : i32
    %c0_i32_0 = arith.constant 0 : i32
    return %arg0, %c0_i32 : i32, i32
  }
}

</mosaic_0001>

<llo_original>
// kernel: tpu_custom_call.1
$region0: #{tpu_custom_call.1}
  #allocation0 [shape = 'u32[]', space=smem, size = 0x4, offset = 0x4, fixed_abs, tag = 'smem constant byte address 0x4 - core index']
  #allocation1 [shape = 'u32[144,128]{1,0:T(1,128)}', space=vmem, size = 0x12000, scoped, tag = 'internal scratch']
  #allocation2 [shape = 'f32[128,128]{1,0:T(8,128)}', space=vmem, size = 0x10000, scoped, tag = 'scratch operand']
  %s0 = inlined_call_operand.vmem [shape: bf16[256,256], index: 0, kind: input, shape index: {}]
  %s1 = inlined_call_operand.vmem [shape: bf16[256,128], index: 1, kind: input, shape index: {}]
  %s2 = inlined_call_operand.vmem [shape: f32[256,1], index: 2, kind: input, shape index: {}]
  %s3 = inlined_call_operand.vmem [shape: f32[256,1], index: 3, kind: input, shape index: {}]
  %s4 = inlined_call_operand.vmem [shape: bf16[128,128], index: 4, kind: input, shape index: {}]
  %s5 = inlined_call_operand.vmem [shape: f32[1,128], index: 5, kind: input, shape index: {}]
  %s6 = inlined_call_operand.hbm [shape: bf16[256,128], index: 6, kind: output, shape index: {}]
  %s7 = sld [smem:[#allocation0]]
  $region106: #{tpu_custom_call.1} parent=0
    _
  %s9 = ssub.s32 1, %s7
  %s10 = scalar_select 0, %s9, %s7
  $region1: #{tpu_custom_call.1} parent=0
    #allocation3 [shape = 'u8[65536]{0}', space=vmem, size = 0x10000, scoped, tag = 'input window, operand 0']
    #allocation4 [shape = 'u8[65536]{0}', space=vmem, size = 0x10000, scoped, tag = 'output window, operand 0']
    #allocation5 [shape = 's32[2]{0}', space=sflag, size = 0x8, scoped, tag = 'scoped memory for tpu_custom_call.1']
    %11 = vsyncpa [#allocation5], 0
    %s12 = scalar_lea.sflag [#allocation5], 1
    %13 = vsyncpa %s12, 0
    loop: start=0, step=1, limit=6
    $region2: #{tpu_custom_call.1} parent=1 // loop_pre_header
      _
    $region3: #{tpu_custom_call.1} parent=1 // loop_header
      %s15 = sphi 0, %s19
      %p16 = scmp.ge.s32.totalorder %s15, 6
      %s22 = sphi 0, %s34
      %s23 = sphi 0, %s30
      %s24 = sphi 0, %s22
      %s25 = sphi 0, %s23
      %s26 = sphi 0, %s24
      %s27 = sphi 0, %s25
      %s39 = sphi 0, %s41
      %s42 = sphi 0, %s39
      %s43 = sphi 0, %s42
      %s59 = sphi 0, %s43
      %s65 = sphi 0, %s67
      %s68 = sphi 0, %s65
      %s69 = sphi 0, %s68
      %s85 = sphi 0, %s69
      %s91 = sphi 0, %s93
      %s94 = sphi 0, %s91
      %s95 = sphi 0, %s94
      %s111 = sphi 0, %s95
      %s117 = sphi 0, %s119
      %s120 = sphi 0, %s117
      %s121 = sphi 0, %s120
      %s137 = sphi 0, %s121
      %s141 = sphi 0, %s141
      %s143 = sphi 0, %s141
      %s144 = sphi 0, %s143
      %s158 = sphi 0, %s144
      %s162 = sphi 0, %s162
      %s164 = sphi 0, %s162
      %s165 = sphi 0, %s164
      %s179 = sphi 0, %s165
      %s185 = sphi 0, %s187
      %s188 = sphi 0, %s185
      %s189 = sphi 0, %s188
      %s205 = sphi 0, %s189
    $region4: #{tpu_custom_call.1} parent=1 // loop_header_branch
      %18 = sbr.rel (%p16) target = $region8
    $region5: #{tpu_custom_call.1} parent=1 // loop_body
      %s20 = ssub.s32 %s15, 1
      %s21 = ssub.s32 %s15, 2
      %s28 = sadd.s32 1, %s23
      %p29 = scmp.ge.s32.totalorder %s28, 2
      %s30 = scalar_select %p29, 0, %s28
      %s31 = sadd.s32 1, %s22
      %s32 = scalar_select %p29, %s31, %s22
      %p33 = scmp.ge.s32.totalorder %s32, 2
      %s34 = scalar_select %p33, 0, %s32
      %s35 = ssub.s32 %s22, %s34
      %s36 = ssub.s32 %s23, %s30
      %s37 = sor.u32 %s35, %s36
      %p38 = scmp.eq.s32.totalorder %s37, 0
      %s40 = sadd.s32 %s39, 1
      %s41 = scalar_select %p38, %s39, %s40
      %p44 = pneg %p38
      %p45 = scmp.eq.s32.totalorder %s15, 3
      %p46 = por %p44, %p45
      %p47 = scmp.ne.s32.totalorder %s39, %s42
      %p48 = scmp.eq.s32.totalorder %s15, 0
      %p49 = por %p47, %p48
      %p50 = scmp.ne.s32.totalorder %s39, %s42
      %p51 = scmp.eq.s32.totalorder %s20, 3
      %p52 = por %p50, %p51
      %p53 = scmp.ne.s32.totalorder %s42, %s43
      %p54 = scmp.eq.s32.totalorder %s20, 0
      %p55 = por %p53, %p54
      %p56 = scmp.ne.s32.totalorder %s42, %s43
      %p57 = scmp.eq.s32.totalorder %s21, 3
      %p58 = por %p56, %p57
      %p60 = scmp.ne.s32.totalorder %s43, %s59
      %p61 = scmp.eq.s32.totalorder %s21, 0
      %p62 = por %p60, %p61
      %s63 = ssub.s32 %s23, %s30
      %p64 = scmp.eq.s32.totalorder %s63, 0
      %s66 = sadd.s32 %s65, 1
      %s67 = scalar_select %p64, %s65, %s66
      %p70 = pneg %p64
      %p71 = scmp.eq.s32.totalorder %s15, 3
      %p72 = por %p70, %p71
      %p73 = scmp.ne.s32.totalorder %s65, %s68
      %p74 = scmp.eq.s32.totalorder %s15, 0
      %p75 = por %p73, %p74
      %p76 = scmp.ne.s32.totalorder %s65, %s68
      %p77 = scmp.eq.s32.totalorder %s20, 3
      %p78 = por %p76, %p77
      %p79 = scmp.ne.s32.totalorder %s68, %s69
      %p80 = scmp.eq.s32.totalorder %s20, 0
      %p81 = por %p79, %p80
      %p82 = scmp.ne.s32.totalorder %s68, %s69
      %p83 = scmp.eq.s32.totalorder %s21, 3
      %p84 = por %p82, %p83
      %p86 = scmp.ne.s32.totalorder %s69, %s85
      %p87 = scmp.eq.s32.totalorder %s21, 0
      %p88 = por %p86, %p87
      %s89 = ssub.s32 %s23, %s30
      %p90 = scmp.eq.s32.totalorder %s89, 0
      %s92 = sadd.s32 %s91, 1
      %s93 = scalar_select %p90, %s91, %s92
      %p96 = pneg %p90
      %p97 = scmp.eq.s32.totalorder %s15, 3
      %p98 = por %p96, %p97
      %p99 = scmp.ne.s32.totalorder %s91, %s94
      %p100 = scmp.eq.s32.totalorder %s15, 0
      %p101 = por %p99, %p100
      %p102 = scmp.ne.s32.totalorder %s91, %s94
      %p103 = scmp.eq.s32.totalorder %s20, 3
      %p104 = por %p102, %p103
      %p105 = scmp.ne.s32.totalorder %s94, %s95
      %p106 = scmp.eq.s32.totalorder %s20, 0
      %p107 = por %p105, %p106
      %p108 = scmp.ne.s32.totalorder %s94, %s95
      %p109 = scmp.eq.s32.totalorder %s21, 3
      %p110 = por %p108, %p109
      %p112 = scmp.ne.s32.totalorder %s95, %s111
      %p113 = scmp.eq.s32.totalorder %s21, 0
      %p114 = por %p112, %p113
      %s115 = ssub.s32 %s22, %s34
      %p116 = scmp.eq.s32.totalorder %s115, 0
      %s118 = sadd.s32 %s117, 1
      %s119 = scalar_select %p116, %s117, %s118
      %p122 = pneg %p116
      %p123 = scmp.eq.s32.totalorder %s15, 3
      %p124 = por %p122, %p123
      %p125 = scmp.ne.s32.totalorder %s117, %s120
      %p126 = scmp.eq.s32.totalorder %s15, 0
      %p127 = por %p125, %p126
      %p128 = scmp.ne.s32.totalorder %s117, %s120
      %p129 = scmp.eq.s32.totalorder %s20, 3
      %p130 = por %p128, %p129
      %p131 = scmp.ne.s32.totalorder %s120, %s121
      %p132 = scmp.eq.s32.totalorder %s20, 0
      %p133 = por %p131, %p132
      %p134 = scmp.ne.s32.totalorder %s120, %s121
      %p135 = scmp.eq.s32.totalorder %s21, 3
      %p136 = por %p134, %p135
      %p138 = scmp.ne.s32.totalorder %s121, %s137
      %p139 = scmp.eq.s32.totalorder %s21, 0
      %p140 = por %p138, %p139
      %s142 = sadd.s32 %s141, 1
      %p145 = scmp.eq.s32.totalorder %s15, 3
      %p146 = scmp.ne.s32.totalorder %s141, %s143
      %p147 = scmp.eq.s32.totalorder %s15, 0
      %p148 = por %p146, %p147
      %p149 = scmp.ne.s32.totalorder %s141, %s143
      %p150 = scmp.eq.s32.totalorder %s20, 3
      %p151 = por %p149, %p150
      %p152 = scmp.ne.s32.totalorder %s143, %s144
      %p153 = scmp.eq.s32.totalorder %s20, 0
      %p154 = por %p152, %p153
      %p155 = scmp.ne.s32.totalorder %s143, %s144
      %p156 = scmp.eq.s32.totalorder %s21, 3
      %p157 = por %p155, %p156
      %p159 = scmp.ne.s32.totalorder %s144, %s158
      %p160 = scmp.eq.s32.totalorder %s21, 0
      %p161 = por %p159, %p160
      %s163 = sadd.s32 %s162, 1
      %p166 = scmp.eq.s32.totalorder %s15, 3
      %p167 = scmp.ne.s32.totalorder %s162, %s164
      %p168 = scmp.eq.s32.totalorder %s15, 0
      %p169 = por %p167, %p168
      %p170 = scmp.ne.s32.totalorder %s162, %s164
      %p171 = scmp.eq.s32.totalorder %s20, 3
      %p172 = por %p170, %p171
      %p173 = scmp.ne.s32.totalorder %s164, %s165
      %p174 = scmp.eq.s32.totalorder %s20, 0
      %p175 = por %p173, %p174
      %p176 = scmp.ne.s32.totalorder %s164, %s165
      %p177 = scmp.eq.s32.totalorder %s21, 3
      %p178 = por %p176, %p177
      %p180 = scmp.ne.s32.totalorder %s165, %s179
      %p181 = scmp.eq.s32.totalorder %s21, 0
      %p182 = por %p180, %p181
      %s183 = ssub.s32 %s22, %s34
      %p184 = scmp.eq.s32.totalorder %s183, 0
      %s186 = sadd.s32 %s185, 1
      %s187 = scalar_select %p184, %s185, %s186
      %p190 = pneg %p184
      %p191 = scmp.eq.s32.totalorder %s15, 3
      %p192 = por %p190, %p191
      %p193 = scmp.ne.s32.totalorder %s185, %s188
      %p194 = scmp.eq.s32.totalorder %s15, 0
      %p195 = por %p193, %p194
      %p196 = scmp.ne.s32.totalorder %s185, %s188
      %p197 = scmp.eq.s32.totalorder %s20, 3
      %p198 = por %p196, %p197
      %p199 = scmp.ne.s32.totalorder %s188, %s189
      %p200 = scmp.eq.s32.totalorder %s20, 0
      %p201 = por %p199, %p200
      %p202 = scmp.ne.s32.totalorder %s188, %s189
      %p203 = scmp.eq.s32.totalorder %s21, 3
      %p204 = por %p202, %p203
      %p206 = scmp.ne.s32.totalorder %s189, %s205
      %p207 = scmp.eq.s32.totalorder %s21, 0
      %p208 = por %p206, %p207
      %p209 = scmp.le.s32.totalorder 1, %s15
      %p210 = scmp.lt.s32.totalorder %s15, 5
      %p211 = pnand %p209, %p210
      %p212 = pneg %p211
      // Predicated region
      $region9: #{tpu_custom_call.1} parent=5 // pred_check
        _
      $region10: #{tpu_custom_call.1} parent=5 // pred_check_branch
        %214 = sbr.rel (%p211) target = $region12
      $region11: #{tpu_custom_call.1} parent=5 // pred_region
        %s215 = ssub.s32 %s15, 1
        // Predicated region
        $region13: #{tpu_custom_call.1} parent=11 // pred_check
          %p216 = pneg %p154
        $region14: #{tpu_custom_call.1} parent=11 // pred_check_branch
          %218 = sbr.rel (%p216) target = $region16
        $region15: #{tpu_custom_call.1} parent=11 // pred_region
          _
        $region16: #{tpu_custom_call.1} parent=11 // pred_fallthru
          _
        // Predicated region
        $region17: #{tpu_custom_call.1} parent=11 // pred_check
          %p219 = pneg %p175
        $region18: #{tpu_custom_call.1} parent=11 // pred_check_branch
          %221 = sbr.rel (%p219) target = $region20
        $region19: #{tpu_custom_call.1} parent=11 // pred_region
          _
        $region20: #{tpu_custom_call.1} parent=11 // pred_fallthru
          _
      $region12: #{tpu_custom_call.1} parent=5 // pred_fallthru
        _
      %p222 = scmp.lt.s32.totalorder %s15, 4
      // Predicated region
      $region21: #{tpu_custom_call.1} parent=5 // pred_check
        %p223 = pneg %p222
      $region22: #{tpu_custom_call.1} parent=5 // pred_check_branch
        %225 = sbr.rel (%p223) target = $region24
      $region23: #{tpu_custom_call.1} parent=5 // pred_region
        // Predicated region
        $region25: #{tpu_custom_call.1} parent=23 // pred_check
          %p226 = pneg %p49
        $region26: #{tpu_custom_call.1} parent=23 // pred_check_branch
          %228 = sbr.rel (%p226) target = $region28
        $region27: #{tpu_custom_call.1} parent=23 // pred_region
          %s229 = sand.u32 %s39, 1
          %s230 = sand.u32 %s39, 1
          %s231 = smul.addr %s230, 64
          %s232 = scalar_lea.vmem [#allocation3], %s231
          %s233 = smul.u32 16, %s22
          %s234 = smul.addr %s233, 2
          %s235 = sadd.s32 %s23, %s234
          %s236 = smul.addr %s235, 4
          %s237 = scalar_lea.vmem %s0, %s236
          // Predicated region
          $region29: #{tpu_custom_call.1} parent=27 // pred_check
            _
          $region30: #{tpu_custom_call.1} parent=27 // pred_check_branch
            %239 = sbr.rel (0) target = $region32
          $region31: #{tpu_custom_call.1} parent=27 // pred_region
            // Predicated region
            $region33: #{tpu_custom_call.1} parent=31 // pred_check
              _
            $region34: #{tpu_custom_call.1} parent=31 // pred_check_branch
              %241 = sbr.rel target = $region36
            $region35: #{tpu_custom_call.1} parent=31 // pred_region
              // Predicated region
              $region48: #{tpu_custom_call.1} parent=35 // pred_check
                _
              $region49: #{tpu_custom_call.1} parent=35 // pred_check_branch
                %287 = sbr.rel (0) target = $region51
              $region50: #{tpu_custom_call.1} parent=35 // pred_region
                loop: start=0, step=1, limit=1
                $region52: #{tpu_custom_call.1} parent=50 // loop_pre_header
                  _
                $region53: #{tpu_custom_call.1} parent=50 // loop_header
                  %s289 = sphi 0, %s293
                  %p290 = scmp.ge.s32.totalorder %s289, 1
                  %s294 = sphi %s237, %s237
                  %s295 = sphi %s232, %s232
                $region54: #{tpu_custom_call.1} parent=50 // loop_header_branch
                  %292 = sbr.rel (%p290) target = $region58
                $region55: #{tpu_custom_call.1} parent=50 // loop_body
                  _
                $region56: #{tpu_custom_call.1} parent=50 // loop_footer
                  %s293 = sadd.s32 1, %s289
                $region57: #{tpu_custom_call.1} parent=50 // loop_footer_branch
                  %288 = sbr.rel target = $region53
                $region58: #{tpu_custom_call.1} parent=50 // loop_exit
                  _
                %s297 = ssub.s32 16, 1
                loop: start=0, step=1, limit=1
                $region59: #{tpu_custom_call.1} parent=50 // loop_pre_header
                  _
                $region60: #{tpu_custom_call.1} parent=50 // loop_header
                  %s299 = sphi 0, %s303
                  %p300 = scmp.ge.s32.totalorder %s299, 1
                  %s304 = sphi %s237, %s237
                  %s305 = sphi %s232, %s232
                $region61: #{tpu_custom_call.1} parent=50 // loop_header_branch
                  %302 = sbr.rel (%p300) target = $region65
                $region62: #{tpu_custom_call.1} parent=50 // loop_body
                  %v306 = vld [vmem:[%s304] sm:%s297]
                  %307 = vst [vmem:[%s305] sm:%s297] %v306
                  %v308 = vld [vmem:[%s304 + $0x8] sm:%s297]
                  %309 = vst [vmem:[%s305 + $0x4] sm:%s297] %v308
                  %v310 = vld [vmem:[%s304 + $0x10] sm:%s297]
                  %311 = vst [vmem:[%s305 + $0x8] sm:%s297] %v310
                  %v312 = vld [vmem:[%s304 + $0x18] sm:%s297]
                  %313 = vst [vmem:[%s305 + $0xc] sm:%s297] %v312
                  %v314 = vld [vmem:[%s304 + $0x20] sm:%s297]
                  %315 = vst [vmem:[%s305 + $0x10] sm:%s297] %v314
                  %v316 = vld [vmem:[%s304 + $0x28] sm:%s297]
                  %317 = vst [vmem:[%s305 + $0x14] sm:%s297] %v316
                  %v318 = vld [vmem:[%s304 + $0x30] sm:%s297]
                  %319 = vst [vmem:[%s305 + $0x18] sm:%s297] %v318
                  %v320 = vld [vmem:[%s304 + $0x38] sm:%s297]
                  %321 = vst [vmem:[%s305 + $0x1c] sm:%s297] %v320
                  %v322 = vld [vmem:[%s304 + $0x40] sm:%s297]
                  %323 = vst [vmem:[%s305 + $0x20] sm:%s297] %v322
                  %v324 = vld [vmem:[%s304 + $0x48] sm:%s297]
                  %325 = vst [vmem:[%s305 + $0x24] sm:%s297] %v324
                  %v326 = vld [vmem:[%s304 + $0x50] sm:%s297]
                  %327 = vst [vmem:[%s305 + $0x28] sm:%s297] %v326
                  %v328 = vld [vmem:[%s304 + $0x58] sm:%s297]
                  %329 = vst [vmem:[%s305 + $0x2c] sm:%s297] %v328
                  %v330 = vld [vmem:[%s304 + $0x60] sm:%s297]
                  %331 = vst [vmem:[%s305 + $0x30] sm:%s297] %v330
                  %v332 = vld [vmem:[%s304 + $0x68] sm:%s297]
                  %333 = vst [vmem:[%s305 + $0x34] sm:%s297] %v332
                  %v334 = vld [vmem:[%s304 + $0x70] sm:%s297]
                  %335 = vst [vmem:[%s305 + $0x38] sm:%s297] %v334
                  %v336 = vld [vmem:[%s304 + $0x78] sm:%s297]
                  %337 = vst [vmem:[%s305 + $0x3c] sm:%s297] %v336
                $region63: #{tpu_custom_call.1} parent=50 // loop_footer
                  %s303 = sadd.s32 1, %s299
                $region64: #{tpu_custom_call.1} parent=50 // loop_footer_branch
                  %298 = sbr.rel target = $region60
                $region65: #{tpu_custom_call.1} parent=50 // loop_exit
                  _
              $region51: #{tpu_custom_call.1} parent=35 // pred_fallthru
                _
            $region36: #{tpu_custom_call.1} parent=31 // pred_fallthru
              _
            // Predicated region
            $region37: #{tpu_custom_call.1} parent=31 // pred_check
              _
            $region38: #{tpu_custom_call.1} parent=31 // pred_check_branch
              %243 = sbr.rel (0) target = $region40
            $region39: #{tpu_custom_call.1} parent=31 // pred_region
              %s245 = ssub.s32 16, 1
              loop: start=0, step=1, limit=1
              $region41: #{tpu_custom_call.1} parent=39 // loop_pre_header
                _
              $region42: #{tpu_custom_call.1} parent=39 // loop_header
                %s247 = sphi 0, %s251
                %p248 = scmp.ge.s32.totalorder %s247, 1
                %s252 = sphi %s237, %s237
                %s253 = sphi %s232, %s232
              $region43: #{tpu_custom_call.1} parent=39 // loop_header_branch
                %250 = sbr.rel (%p248) target = $region47
              $region44: #{tpu_custom_call.1} parent=39 // loop_body
                %v254 = vld [vmem:[%s252] sm:%s245]
                %255 = vst [vmem:[%s253] sm:%s245] %v254
                %v256 = vld [vmem:[%s252 + $0x8] sm:%s245]
                %257 = vst [vmem:[%s253 + $0x4] sm:%s245] %v256
                %v258 = vld [vmem:[%s252 + $0x10] sm:%s245]
                %259 = vst [vmem:[%s253 + $0x8] sm:%s245] %v258
                %v260 = vld [vmem:[%s252 + $0x18] sm:%s245]
                %261 = vst [vmem:[%s253 + $0xc] sm:%s245] %v260
                %v262 = vld [vmem:[%s252 + $0x20] sm:%s245]
                %263 = vst [vmem:[%s253 + $0x10] sm:%s245] %v262
                %v264 = vld [vmem:[%s252 + $0x28] sm:%s245]
                %265 = vst [vmem:[%s253 + $0x14] sm:%s245] %v264
                %v266 = vld [vmem:[%s252 + $0x30] sm:%s245]
                %267 = vst [vmem:[%s253 + $0x18] sm:%s245] %v266
                %v268 = vld [vmem:[%s252 + $0x38] sm:%s245]
                %269 = vst [vmem:[%s253 + $0x1c] sm:%s245] %v268
                %v270 = vld [vmem:[%s252 + $0x40] sm:%s245]
                %271 = vst [vmem:[%s253 + $0x20] sm:%s245] %v270
                %v272 = vld [vmem:[%s252 + $0x48] sm:%s245]
                %273 = vst [vmem:[%s253 + $0x24] sm:%s245] %v272
                %v274 = vld [vmem:[%s252 + $0x50] sm:%s245]
                %275 = vst [vmem:[%s253 + $0x28] sm:%s245] %v274
                %v276 = vld [vmem:[%s252 + $0x58] sm:%s245]
                %277 = vst [vmem:[%s253 + $0x2c] sm:%s245] %v276
                %v278 = vld [vmem:[%s252 + $0x60] sm:%s245]
                %279 = vst [vmem:[%s253 + $0x30] sm:%s245] %v278
                %v280 = vld [vmem:[%s252 + $0x68] sm:%s245]
                %281 = vst [vmem:[%s253 + $0x34] sm:%s245] %v280
                %v282 = vld [vmem:[%s252 + $0x70] sm:%s245]
                %283 = vst [vmem:[%s253 + $0x38] sm:%s245] %v282
                %v284 = vld [vmem:[%s252 + $0x78] sm:%s245]
                %285 = vst [vmem:[%s253 + $0x3c] sm:%s245] %v284
              $region45: #{tpu_custom_call.1} parent=39 // loop_footer
                %s251 = sadd.s32 1, %s247
              $region46: #{tpu_custom_call.1} parent=39 // loop_footer_branch
                %246 = sbr.rel target = $region42
              $region47: #{tpu_custom_call.1} parent=39 // loop_exit
                _
            $region40: #{tpu_custom_call.1} parent=31 // pred_fallthru
              _
          $region32: #{tpu_custom_call.1} parent=27 // pred_fallthru
            _
          %338 = vnop
        $region28: #{tpu_custom_call.1} parent=23 // pred_fallthru
          _
        // Predicated region
        $region66: #{tpu_custom_call.1} parent=23 // pred_check
          %p339 = pneg %p75
        $region67: #{tpu_custom_call.1} parent=23 // pred_check_branch
          %341 = sbr.rel (%p339) target = $region69
        $region68: #{tpu_custom_call.1} parent=23 // pred_region
          %s342 = smul.u32 16, %s23
          %p343 = scmp.lt.s32.totalorder %s342, 31
          %s344 = scalar_select %p343, %s342, 31
          %s345 = smul.addr %s344, 4
          %s346 = scalar_lea.vmem %s1, %s345
          %s347 = smul.u32 16, %s23
        $region69: #{tpu_custom_call.1} parent=23 // pred_fallthru
          _
        // Predicated region
        $region70: #{tpu_custom_call.1} parent=23 // pred_check
          %p348 = pneg %p101
        $region71: #{tpu_custom_call.1} parent=23 // pred_check_branch
          %350 = sbr.rel (%p348) target = $region73
        $region72: #{tpu_custom_call.1} parent=23 // pred_region
          %s351 = smul.u32 16, %s23
          %p352 = scmp.lt.s32.totalorder %s351, 31
          %s353 = scalar_select %p352, %s351, 31
          %s354 = smul.addr %s353, 8
          %s355 = scalar_lea.vmem %s2, %s354
          %s356 = smul.u32 16, %s23
        $region73: #{tpu_custom_call.1} parent=23 // pred_fallthru
          _
        // Predicated region
        $region74: #{tpu_custom_call.1} parent=23 // pred_check
          %p357 = pneg %p127
        $region75: #{tpu_custom_call.1} parent=23 // pred_check_branch
          %359 = sbr.rel (%p357) target = $region77
        $region76: #{tpu_custom_call.1} parent=23 // pred_region
          %s360 = smul.u32 16, %s22
          %p361 = scmp.lt.s32.totalorder %s360, 31
          %s362 = scalar_select %p361, %s360, 31
          %s363 = smul.addr %s362, 8
          %s364 = scalar_lea.vmem %s3, %s363
          %s365 = smul.u32 16, %s22
        $region77: #{tpu_custom_call.1} parent=23 // pred_fallthru
          _
      $region24: #{tpu_custom_call.1} parent=5 // pred_fallthru
        _
      %p366 = scmp.le.s32.totalorder 1, %s15
      %p367 = scmp.lt.s32.totalorder %s15, 5
      %p368 = pnand %p366, %p367
      %p369 = pneg %p368
      // Predicated region
      $region78: #{tpu_custom_call.1} parent=5 // pred_check
        _
      $region79: #{tpu_custom_call.1} parent=5 // pred_check_branch
        %371 = sbr.rel (%p368) target = $region81
      $region80: #{tpu_custom_call.1} parent=5 // pred_region
        %s372 = ssub.s32 %s15, 1
        %s373 = sand.u32 %s42, 1
        %s374 = sand.u32 %s42, 1
        %s375 = smul.addr %s374, 64
        %s376 = scalar_lea.vmem [#allocation3], %s375
        // Predicated region
        $region82: #{tpu_custom_call.1} parent=80 // pred_check
          %p377 = pneg %p55
        $region83: #{tpu_custom_call.1} parent=80 // pred_check_branch
          %379 = sbr.rel (%p377) target = $region85
        $region84: #{tpu_custom_call.1} parent=80 // pred_region
          _
        $region85: #{tpu_custom_call.1} parent=80 // pred_fallthru
          _
        %s380 = sand.u32 %s42, 1
        %s381 = sand.u32 %s42, 1
        %s382 = smul.addr %s381, 64
        %s383 = scalar_lea.vmem [#allocation3], %s382
        %p384 = pneg %p55
        %p385 = pneg %p52
        %s386 = smul.u32 16, %s25
        %p387 = scmp.lt.s32.totalorder %s386, 31
        %s388 = scalar_select %p387, %s386, 31
        %s389 = smul.addr %s388, 4
        %s390 = scalar_lea.vmem %s1, %s389
        %p391 = pneg %p81
        %p392 = pneg %p78
        %s393 = smul.u32 16, %s25
        %p394 = scmp.lt.s32.totalorder %s393, 31
        %s395 = scalar_select %p394, %s393, 31
        %s396 = smul.addr %s395, 8
        %s397 = scalar_lea.vmem %s2, %s396
        %p398 = pneg %p107
        %p399 = pneg %p104
        %s400 = smul.u32 16, %s24
        %p401 = scmp.lt.s32.totalorder %s400, 31
        %s402 = scalar_select %p401, %s400, 31
        %s403 = smul.addr %s402, 8
        %s404 = scalar_lea.vmem %s3, %s403
        %p405 = pneg %p133
        %p406 = pneg %p130
        %p407 = pneg %p154
        %p408 = pneg %p151
        %p409 = pneg %p175
        %p410 = pneg %p172
        %p411 = pneg %p201
        %p412 = pneg %p198
        %s413 = sand.u32 %s188, 1
        %s414 = scalar_lea.sflag [#allocation5], %s413
        %s415 = sand.u32 %s188, 1
        %s416 = smul.addr %s415, 64
        %s417 = scalar_lea.vmem [#allocation4], %s416
        %s418 = smul.u32 16, %s24
        %s419 = smul.u32 16, %s25
        %p420 = scmp.lt.s32.totalorder %s419, 31
        %s421 = scalar_select %p420, %s419, 31
        %s422 = smul.addr %s421, 4
        %s423 = scalar_lea.vmem %s1, %s422
        %s424 = smul.u32 16, %s25
        %s425 = smul.u32 16, %s25
        %p426 = scmp.lt.s32.totalorder %s425, 31
        %s427 = scalar_select %p426, %s425, 31
        %s428 = smul.addr %s427, 8
        %s429 = scalar_lea.vmem %s2, %s428
        %s430 = smul.u32 16, %s25
        %s431 = smul.u32 16, %s24
        %p432 = scmp.lt.s32.totalorder %s431, 31
        %s433 = scalar_select %p432, %s431, 31
        %s434 = smul.addr %s433, 8
        %s435 = scalar_lea.vmem %s3, %s434
        %s436 = smul.u32 16, %s24
        %s437 = smul.u32 16, %s24
        %p439 = scmp.eq.s32.totalorder %s25, 0
        // Predicated region
        $region86: #{tpu_custom_call.1} parent=80 // pred_check
          %p440 = pneg %p439
        $region87: #{tpu_custom_call.1} parent=80 // pred_check_branch
          %442 = sbr.rel (%p440) target = $region89
        $region88: #{tpu_custom_call.1} parent=80 // pred_region
          %443 = vst [vmem:[#allocation2] sm:$0xff] 0.0
          %444 = vst [vmem:[#allocation2 + $0x8] sm:$0xff] 0.0
          %445 = vst [vmem:[#allocation2 + $0x10] sm:$0xff] 0.0
          %446 = vst [vmem:[#allocation2 + $0x18] sm:$0xff] 0.0
          %447 = vst [vmem:[#allocation2 + $0x20] sm:$0xff] 0.0
          %448 = vst [vmem:[#allocation2 + $0x28] sm:$0xff] 0.0
          %449 = vst [vmem:[#allocation2 + $0x30] sm:$0xff] 0.0
          %450 = vst [vmem:[#allocation2 + $0x38] sm:$0xff] 0.0
          %451 = vst [vmem:[#allocation2 + $0x40] sm:$0xff] 0.0
          %452 = vst [vmem:[#allocation2 + $0x48] sm:$0xff] 0.0
          %453 = vst [vmem:[#allocation2 + $0x50] sm:$0xff] 0.0
          %454 = vst [vmem:[#allocation2 + $0x58] sm:$0xff] 0.0
          %455 = vst [vmem:[#allocation2 + $0x60] sm:$0xff] 0.0
          %456 = vst [vmem:[#allocation2 + $0x68] sm:$0xff] 0.0
          %457 = vst [vmem:[#allocation2 + $0x70] sm:$0xff] 0.0
          %458 = vst [vmem:[#allocation2 + $0x78] sm:$0xff] 0.0
        $region89: #{tpu_custom_call.1} parent=80 // pred_fallthru
          _
        %v459 = vld [vmem:[%s423] sm:$0xf]
        %v460 = vld [vmem:[%s423 + $0x4] sm:$0xf]
        %v461 = vld [vmem:[%s423 + $0x8] sm:$0xf]
        %v462 = vld [vmem:[%s423 + $0xc] sm:$0xf]
        %v463 = vld [vmem:[%s423 + $0x10] sm:$0xf]
        %v464 = vld [vmem:[%s423 + $0x14] sm:$0xf]
        %v465 = vld [vmem:[%s423 + $0x18] sm:$0xf]
        %v466 = vld [vmem:[%s423 + $0x1c] sm:$0xf]
        %v467 = vld [vmem:[%s423 + $0x20] sm:$0xf]
        %v468 = vld [vmem:[%s423 + $0x24] sm:$0xf]
        %v469 = vld [vmem:[%s423 + $0x28] sm:$0xf]
        %v470 = vld [vmem:[%s423 + $0x2c] sm:$0xf]
        %v471 = vld [vmem:[%s423 + $0x30] sm:$0xf]
        %v472 = vld [vmem:[%s423 + $0x34] sm:$0xf]
        %v473 = vld [vmem:[%s423 + $0x38] sm:$0xf]
        %v474 = vld [vmem:[%s423 + $0x3c] sm:$0xf]
        %v475 = vunpack.c.l.bf16 %v459
        %v476 = vunpack.c.l.bf16 %v460
        %v477 = vunpack.c.l.bf16 %v461
        %v478 = vunpack.c.l.bf16 %v462
        %v479 = vunpack.c.l.bf16 %v463
        %v480 = vunpack.c.l.bf16 %v464
        %v481 = vunpack.c.l.bf16 %v465
        %v482 = vunpack.c.l.bf16 %v466
        %v483 = vunpack.c.l.bf16 %v467
        %v484 = vunpack.c.l.bf16 %v468
        %v485 = vunpack.c.l.bf16 %v469
        %v486 = vunpack.c.l.bf16 %v470
        %v487 = vunpack.c.l.bf16 %v471
        %v488 = vunpack.c.l.bf16 %v472
        %v489 = vunpack.c.l.bf16 %v473
        %v490 = vunpack.c.l.bf16 %v474
        %v491 = vld [vmem:[%s429] sm:$0xff]
        %v492 = vld [vmem:[%s429 + $0x8] sm:$0xff]
        %v493 = vld [vmem:[%s429 + $0x10] sm:$0xff]
        %v494 = vld [vmem:[%s429 + $0x18] sm:$0xff]
        %v495 = vld [vmem:[%s429 + $0x20] sm:$0xff]
        %v496 = vld [vmem:[%s429 + $0x28] sm:$0xff]
        %v497 = vld [vmem:[%s429 + $0x30] sm:$0xff]
        %v498 = vld [vmem:[%s429 + $0x38] sm:$0xff]
        %v499 = vld [vmem:[%s429 + $0x40] sm:$0xff]
        %v500 = vld [vmem:[%s429 + $0x48] sm:$0xff]
        %v501 = vld [vmem:[%s429 + $0x50] sm:$0xff]
        %v502 = vld [vmem:[%s429 + $0x58] sm:$0xff]
        %v503 = vld [vmem:[%s429 + $0x60] sm:$0xff]
        %v504 = vld [vmem:[%s429 + $0x68] sm:$0xff]
        %v505 = vld [vmem:[%s429 + $0x70] sm:$0xff]
        %v506 = vld [vmem:[%s429 + $0x78] sm:$0xff]
        %508 = vset.pattern.permute.xlu0 0
        %509 = vperm.xlu0 %508, %v491
        %v510 = vpop.permute.xlu0 %509
        %513 = vset.pattern.permute.xlu0 0
        %514 = vperm.xlu0 %513, %v492
        %v515 = vpop.permute.xlu0 %514
        %518 = vset.pattern.permute.xlu0 0
        %519 = vperm.xlu0 %518, %v493
        %v520 = vpop.permute.xlu0 %519
        %523 = vset.pattern.permute.xlu0 0
        %524 = vperm.xlu0 %523, %v494
        %v525 = vpop.permute.xlu0 %524
        %528 = vset.pattern.permute.xlu0 0
        %529 = vperm.xlu0 %528, %v495
        %v530 = vpop.permute.xlu0 %529
        %533 = vset.pattern.permute.xlu0 0
        %534 = vperm.xlu0 %533, %v496
        %v535 = vpop.permute.xlu0 %534
        %538 = vset.pattern.permute.xlu0 0
        %539 = vperm.xlu0 %538, %v497
        %v540 = vpop.permute.xlu0 %539
        %543 = vset.pattern.permute.xlu0 0
        %544 = vperm.xlu0 %543, %v498
        %v545 = vpop.permute.xlu0 %544
        %548 = vset.pattern.permute.xlu0 0
        %549 = vperm.xlu0 %548, %v499
        %v550 = vpop.permute.xlu0 %549
        %553 = vset.pattern.permute.xlu0 0
        %554 = vperm.xlu0 %553, %v500
        %v555 = vpop.permute.xlu0 %554
        %558 = vset.pattern.permute.xlu0 0
        %559 = vperm.xlu0 %558, %v501
        %v560 = vpop.permute.xlu0 %559
        %563 = vset.pattern.permute.xlu0 0
        %564 = vperm.xlu0 %563, %v502
        %v565 = vpop.permute.xlu0 %564
        %568 = vset.pattern.permute.xlu0 0
        %569 = vperm.xlu0 %568, %v503
        %v570 = vpop.permute.xlu0 %569
        %573 = vset.pattern.permute.xlu0 0
        %574 = vperm.xlu0 %573, %v504
        %v575 = vpop.permute.xlu0 %574
        %578 = vset.pattern.permute.xlu0 0
        %579 = vperm.xlu0 %578, %v505
        %v580 = vpop.permute.xlu0 %579
        %583 = vset.pattern.permute.xlu0 0
        %584 = vperm.xlu0 %583, %v506
        %v585 = vpop.permute.xlu0 %584
        %v587 = vmul.f32 %v475, %v510
        %v588 = vmul.f32 %v476, %v515
        %v589 = vmul.f32 %v477, %v520
        %v590 = vmul.f32 %v478, %v525
        %v591 = vmul.f32 %v479, %v530
        %v592 = vmul.f32 %v480, %v535
        %v593 = vmul.f32 %v481, %v540
        %v594 = vmul.f32 %v482, %v545
        %v595 = vmul.f32 %v483, %v550
        %v596 = vmul.f32 %v484, %v555
        %v597 = vmul.f32 %v485, %v560
        %v598 = vmul.f32 %v486, %v565
        %v599 = vmul.f32 %v487, %v570
        %v600 = vmul.f32 %v488, %v575
        %v601 = vmul.f32 %v489, %v580
        %v602 = vmul.f32 %v490, %v585
        %v603 = vld [vmem:[#allocation2] sm:$0xff]
        %v604 = vld [vmem:[#allocation2 + $0x8] sm:$0xff]
        %v605 = vld [vmem:[#allocation2 + $0x10] sm:$0xff]
        %v606 = vld [vmem:[#allocation2 + $0x18] sm:$0xff]
        %v607 = vld [vmem:[#allocation2 + $0x20] sm:$0xff]
        %v608 = vld [vmem:[#allocation2 + $0x28] sm:$0xff]
        %v609 = vld [vmem:[#allocation2 + $0x30] sm:$0xff]
        %v610 = vld [vmem:[#allocation2 + $0x38] sm:$0xff]
        %v611 = vld [vmem:[#allocation2 + $0x40] sm:$0xff]
        %v612 = vld [vmem:[#allocation2 + $0x48] sm:$0xff]
        %v613 = vld [vmem:[#allocation2 + $0x50] sm:$0xff]
        %v614 = vld [vmem:[#allocation2 + $0x58] sm:$0xff]
        %v615 = vld [vmem:[#allocation2 + $0x60] sm:$0xff]
        %v616 = vld [vmem:[#allocation2 + $0x68] sm:$0xff]
        %v617 = vld [vmem:[#allocation2 + $0x70] sm:$0xff]
        %v618 = vld [vmem:[#allocation2 + $0x78] sm:$0xff]
        %v619 = vld [vmem:[%s376] sm:$0xf]
        %v620 = vld [vmem:[%s376 + $0x4] sm:$0xf]
        %v621 = vld [vmem:[%s376 + $0x8] sm:$0xf]
        %v622 = vld [vmem:[%s376 + $0xc] sm:$0xf]
        %v623 = vld [vmem:[%s376 + $0x10] sm:$0xf]
        %v624 = vld [vmem:[%s376 + $0x14] sm:$0xf]
        %v625 = vld [vmem:[%s376 + $0x18] sm:$0xf]
        %v626 = vld [vmem:[%s376 + $0x1c] sm:$0xf]
        %v627 = vld [vmem:[%s376 + $0x20] sm:$0xf]
        %v628 = vld [vmem:[%s376 + $0x24] sm:$0xf]
        %v629 = vld [vmem:[%s376 + $0x28] sm:$0xf]
        %v630 = vld [vmem:[%s376 + $0x2c] sm:$0xf]
        %v631 = vld [vmem:[%s376 + $0x30] sm:$0xf]
        %v632 = vld [vmem:[%s376 + $0x34] sm:$0xf]
        %v633 = vld [vmem:[%s376 + $0x38] sm:$0xf]
        %v634 = vld [vmem:[%s376 + $0x3c] sm:$0xf]
        %v635 = vpack.c.bf16 %v588, %v587
        %v636 = vpack.c.bf16 %v590, %v589
        %v637 = vpack.c.bf16 %v592, %v591
        %v638 = vpack.c.bf16 %v594, %v593
        %v639 = vpack.c.bf16 %v596, %v595
        %v640 = vpack.c.bf16 %v598, %v597
        %v641 = vpack.c.bf16 %v600, %v599
        %v642 = vpack.c.bf16 %v602, %v601
        %v659 = vunpack.c.l.b16 %v619
        %v660 = vunpack.c.l.b16 %v620
        %v661 = vunpack.c.l.b16 %v621
        %v662 = vunpack.c.l.b16 %v622
        %v663 = vunpack.c.l.b16 %v623
        %v664 = vunpack.c.l.b16 %v624
        %v665 = vunpack.c.l.b16 %v625
        %v666 = vunpack.c.l.b16 %v626
        %v667 = vunpack.c.l.b16 %v627
        %v668 = vunpack.c.l.b16 %v628
        %v669 = vunpack.c.l.b16 %v629
        %v670 = vunpack.c.l.b16 %v630
        %v671 = vunpack.c.l.b16 %v631
        %v672 = vunpack.c.l.b16 %v632
        %v673 = vunpack.c.l.b16 %v633
        %v674 = vunpack.c.l.b16 %v634
        %v675 = vpack.c.b16 %v660, %v659
        %v676 = vpack.c.b16 %v662, %v661
        %v677 = vpack.c.b16 %v664, %v663
        %v678 = vpack.c.b16 %v666, %v665
        %v679 = vpack.c.b16 %v668, %v667
        %v680 = vpack.c.b16 %v670, %v669
        %v681 = vpack.c.b16 %v672, %v671
        %v682 = vpack.c.b16 %v674, %v673
        %691 = vmatprep.subr.bf16.mxu0 0
        %692 = vmatpush1.bf16.msra.mxu0 %v642
        %693 = vmatprep.subr.bf16.mxu0 0
        %694 = vmatpush1.bf16.msra.mxu0 %v641
        %695 = vmatprep.subr.bf16.mxu0 0
        %696 = vmatpush1.bf16.msra.mxu0 %v640
        %697 = vmatprep.subr.bf16.mxu0 0
        %698 = vmatpush1.bf16.msra.mxu0 %v639
        %699 = vmatprep.subr.bf16.mxu0 0
        %700 = vmatpush1.bf16.msra.mxu0 %v638
        %701 = vmatprep.subr.bf16.mxu0 0
        %702 = vmatpush1.bf16.msra.mxu0 %v637
        %703 = vmatprep.subr.bf16.mxu0 0
        %704 = vmatpush1.bf16.msra.mxu0 %v636
        %705 = vmatprep.subr.bf16.mxu0 0
        %706 = vmatpush1.bf16.msra.mxu0 %v635
        %707 = vmatprep.subr.bf16.mxu0 0
        %708 = vmatpush2.bf16.msra.mxu0 0
        %709 = vmatprep.subr.bf16.mxu0 0
        %710 = vmatpush2.bf16.msra.mxu0 0
        %711 = vmatprep.subr.bf16.mxu0 0
        %712 = vmatpush2.bf16.msra.mxu0 0
        %713 = vmatprep.subr.bf16.mxu0 0
        %714 = vmatpush2.bf16.msra.mxu0 0
        %715 = vmatprep.subr.bf16.mxu0 0
        %716 = vmatpush2.bf16.msra.mxu0 0
        %717 = vmatprep.subr.bf16.mxu0 0
        %718 = vmatpush2.bf16.msra.mxu0 0
        %719 = vmatprep.subr.bf16.mxu0 0
        %720 = vmatpush2.bf16.msra.mxu0 0
        %721 = vmatprep.subr.bf16.mxu0 0
        %722 = vmatpush2.bf16.msra.mxu0 0
        %723 = vmatprep.mubr.bf16.mxu0 0
        %724 = vmatmul.mubr.bf16.gmra.mxu0 %v675
        %v725 = vpop.f32.mrf.mxu0
        %v726 = vadd.f32 0.0, %v725
        %v727 = vpop.f32.mrf.mxu0
        %v728 = vpop.f32.mrf.mxu0
        %v729 = vadd.f32 0.0, %v728
        %v730 = vpop.f32.mrf.mxu0
        %731 = vmatprep.mubr.bf16.mxu0 0
        %732 = vmatmul.mubr.bf16.gmra.mxu0 %v676
        %v733 = vpop.f32.mrf.mxu0
        %v734 = vadd.f32 0.0, %v733
        %v735 = vpop.f32.mrf.mxu0
        %v736 = vpop.f32.mrf.mxu0
        %v737 = vadd.f32 0.0, %v736
        %v738 = vpop.f32.mrf.mxu0
        %739 = vmatprep.mubr.bf16.mxu0 0
        %740 = vmatmul.mubr.bf16.gmra.mxu0 %v677
        %v741 = vpop.f32.mrf.mxu0
        %v742 = vadd.f32 0.0, %v741
        %v743 = vpop.f32.mrf.mxu0
        %v744 = vpop.f32.mrf.mxu0
        %v745 = vadd.f32 0.0, %v744
        %v746 = vpop.f32.mrf.mxu0
        %747 = vmatprep.mubr.bf16.mxu0 0
        %748 = vmatmul.mubr.bf16.gmra.mxu0 %v678
        %v749 = vpop.f32.mrf.mxu0
        %v750 = vadd.f32 0.0, %v749
        %v751 = vpop.f32.mrf.mxu0
        %v752 = vpop.f32.mrf.mxu0
        %v753 = vadd.f32 0.0, %v752
        %v754 = vpop.f32.mrf.mxu0
        %755 = vmatprep.mubr.bf16.mxu0 0
        %756 = vmatmul.mubr.bf16.gmra.mxu0 %v679
        %v757 = vpop.f32.mrf.mxu0
        %v758 = vadd.f32 0.0, %v757
        %v759 = vpop.f32.mrf.mxu0
        %v760 = vpop.f32.mrf.mxu0
        %v761 = vadd.f32 0.0, %v760
        %v762 = vpop.f32.mrf.mxu0
        %763 = vmatprep.mubr.bf16.mxu0 0
        %764 = vmatmul.mubr.bf16.gmra.mxu0 %v680
        %v765 = vpop.f32.mrf.mxu0
        %v766 = vadd.f32 0.0, %v765
        %v767 = vpop.f32.mrf.mxu0
        %v768 = vpop.f32.mrf.mxu0
        %v769 = vadd.f32 0.0, %v768
        %v770 = vpop.f32.mrf.mxu0
        %771 = vmatprep.mubr.bf16.mxu0 0
        %772 = vmatmul.mubr.bf16.gmra.mxu0 %v681
        %v773 = vpop.f32.mrf.mxu0
        %v774 = vadd.f32 0.0, %v773
        %v775 = vpop.f32.mrf.mxu0
        %v776 = vpop.f32.mrf.mxu0
        %v777 = vadd.f32 0.0, %v776
        %v778 = vpop.f32.mrf.mxu0
        %779 = vmatprep.mubr.bf16.mxu0 0
        %780 = vmatmul.mubr.bf16.gmra.mxu0 %v682
        %v781 = vpop.f32.mrf.mxu0
        %v782 = vadd.f32 0.0, %v781
        %v783 = vpop.f32.mrf.mxu0
        %v784 = vpop.f32.mrf.mxu0
        %v785 = vadd.f32 0.0, %v784
        %v786 = vpop.f32.mrf.mxu0
        %787 = vdwg.mxu0
        %v788 = vadd.f32 %v603, %v726
        %v789 = vadd.f32 %v604, %v729
        %v790 = vadd.f32 %v605, %v734
        %v791 = vadd.f32 %v606, %v737
        %v792 = vadd.f32 %v607, %v742
        %v793 = vadd.f32 %v608, %v745
        %v794 = vadd.f32 %v609, %v750
        %v795 = vadd.f32 %v610, %v753
        %v796 = vadd.f32 %v611, %v758
        %v797 = vadd.f32 %v612, %v761
        %v798 = vadd.f32 %v613, %v766
        %v799 = vadd.f32 %v614, %v769
        %v800 = vadd.f32 %v615, %v774
        %v801 = vadd.f32 %v616, %v777
        %v802 = vadd.f32 %v617, %v782
        %v803 = vadd.f32 %v618, %v785
        %804 = vst [vmem:[#allocation2] sm:$0xff] %v788
        %805 = vst [vmem:[#allocation2 + $0x8] sm:$0xff] %v789
        %806 = vst [vmem:[#allocation2 + $0x10] sm:$0xff] %v790
        %807 = vst [vmem:[#allocation2 + $0x18] sm:$0xff] %v791
        %808 = vst [vmem:[#allocation2 + $0x20] sm:$0xff] %v792
        %809 = vst [vmem:[#allocation2 + $0x28] sm:$0xff] %v793
        %810 = vst [vmem:[#allocation2 + $0x30] sm:$0xff] %v794
        %811 = vst [vmem:[#allocation2 + $0x38] sm:$0xff] %v795
        %812 = vst [vmem:[#allocation2 + $0x40] sm:$0xff] %v796
        %813 = vst [vmem:[#allocation2 + $0x48] sm:$0xff] %v797
        %814 = vst [vmem:[#allocation2 + $0x50] sm:$0xff] %v798
        %815 = vst [vmem:[#allocation2 + $0x58] sm:$0xff] %v799
        %816 = vst [vmem:[#allocation2 + $0x60] sm:$0xff] %v800
        %817 = vst [vmem:[#allocation2 + $0x68] sm:$0xff] %v801
        %818 = vst [vmem:[#allocation2 + $0x70] sm:$0xff] %v802
        %819 = vst [vmem:[#allocation2 + $0x78] sm:$0xff] %v803
        %p820 = scmp.eq.s32.totalorder %s25, 1
        // Predicated region
        $region90: #{tpu_custom_call.1} parent=80 // pred_check
          %p821 = pneg %p820
        $region91: #{tpu_custom_call.1} parent=80 // pred_check_branch
          %823 = sbr.rel (%p821) target = $region93
        $region92: #{tpu_custom_call.1} parent=80 // pred_region
          %v824 = vld [vmem:[#allocation2] sm:$0xff]
          %v825 = vld [vmem:[#allocation2 + $0x8] sm:$0xff]
          %v826 = vld [vmem:[#allocation2 + $0x10] sm:$0xff]
          %v827 = vld [vmem:[#allocation2 + $0x18] sm:$0xff]
          %v828 = vld [vmem:[#allocation2 + $0x20] sm:$0xff]
          %v829 = vld [vmem:[#allocation2 + $0x28] sm:$0xff]
          %v830 = vld [vmem:[#allocation2 + $0x30] sm:$0xff]
          %v831 = vld [vmem:[#allocation2 + $0x38] sm:$0xff]
          %v832 = vld [vmem:[#allocation2 + $0x40] sm:$0xff]
          %v833 = vld [vmem:[#allocation2 + $0x48] sm:$0xff]
          %v834 = vld [vmem:[#allocation2 + $0x50] sm:$0xff]
          %v835 = vld [vmem:[#allocation2 + $0x58] sm:$0xff]
          %v836 = vld [vmem:[#allocation2 + $0x60] sm:$0xff]
          %v837 = vld [vmem:[#allocation2 + $0x68] sm:$0xff]
          %v838 = vld [vmem:[#allocation2 + $0x70] sm:$0xff]
          %v839 = vld [vmem:[#allocation2 + $0x78] sm:$0xff]
          %v840 = vld [vmem:[%s4] sm:$0xf]
          %v841 = vld [vmem:[%s4 + $0x4] sm:$0xf]
          %v842 = vld [vmem:[%s4 + $0x8] sm:$0xf]
          %v843 = vld [vmem:[%s4 + $0xc] sm:$0xf]
          %v844 = vld [vmem:[%s4 + $0x10] sm:$0xf]
          %v845 = vld [vmem:[%s4 + $0x14] sm:$0xf]
          %v846 = vld [vmem:[%s4 + $0x18] sm:$0xf]
          %v847 = vld [vmem:[%s4 + $0x1c] sm:$0xf]
          %v848 = vld [vmem:[%s4 + $0x20] sm:$0xf]
          %v849 = vld [vmem:[%s4 + $0x24] sm:$0xf]
          %v850 = vld [vmem:[%s4 + $0x28] sm:$0xf]
          %v851 = vld [vmem:[%s4 + $0x2c] sm:$0xf]
          %v852 = vld [vmem:[%s4 + $0x30] sm:$0xf]
          %v853 = vld [vmem:[%s4 + $0x34] sm:$0xf]
          %v854 = vld [vmem:[%s4 + $0x38] sm:$0xf]
          %v855 = vld [vmem:[%s4 + $0x3c] sm:$0xf]
          %v856 = vunpack.c.l.bf16 %v840
          %v857 = vunpack.c.l.bf16 %v841
          %v858 = vunpack.c.l.bf16 %v842
          %v859 = vunpack.c.l.bf16 %v843
          %v860 = vunpack.c.l.bf16 %v844
          %v861 = vunpack.c.l.bf16 %v845
          %v862 = vunpack.c.l.bf16 %v846
          %v863 = vunpack.c.l.bf16 %v847
          %v864 = vunpack.c.l.bf16 %v848
          %v865 = vunpack.c.l.bf16 %v849
          %v866 = vunpack.c.l.bf16 %v850
          %v867 = vunpack.c.l.bf16 %v851
          %v868 = vunpack.c.l.bf16 %v852
          %v869 = vunpack.c.l.bf16 %v853
          %v870 = vunpack.c.l.bf16 %v854
          %v871 = vunpack.c.l.bf16 %v855
          %872 = vmatprep.subr.mxu0 0.0
          %873 = vmatpush1.msra.mxu0 %v871
          %874 = vmatprep.subr.mxu0 0.0
          %875 = vmatpush1.msra.mxu0 %v870
          %876 = vmatprep.subr.mxu0 0.0
          %877 = vmatpush1.msra.mxu0 %v869
          %878 = vmatprep.subr.mxu0 0.0
          %879 = vmatpush1.msra.mxu0 %v868
          %880 = vmatprep.subr.mxu0 0.0
          %881 = vmatpush1.msra.mxu0 %v867
          %882 = vmatprep.subr.mxu0 0.0
          %883 = vmatpush1.msra.mxu0 %v866
          %884 = vmatprep.subr.mxu0 0.0
          %885 = vmatpush1.msra.mxu0 %v865
          %886 = vmatprep.subr.mxu0 0.0
          %887 = vmatpush1.msra.mxu0 %v864
          %888 = vmatprep.subr.mxu0 0.0
          %889 = vmatpush1.msra.mxu0 %v863
          %890 = vmatprep.subr.mxu0 0.0
          %891 = vmatpush1.msra.mxu0 %v862
          %892 = vmatprep.subr.mxu0 0.0
          %893 = vmatpush1.msra.mxu0 %v861
          %894 = vmatprep.subr.mxu0 0.0
          %895 = vmatpush1.msra.mxu0 %v860
          %896 = vmatprep.subr.mxu0 0.0
          %897 = vmatpush1.msra.mxu0 %v859
          %898 = vmatprep.subr.mxu0 0.0
          %899 = vmatpush1.msra.mxu0 %v858
          %900 = vmatprep.subr.mxu0 0.0
          %901 = vmatpush1.msra.mxu0 %v857
          %902 = vmatprep.subr.mxu0 0.0
          %903 = vmatpush1.msra.mxu0 %v856
          %904 = vmatprep.subr.mxu0 0.0
          %905 = vmatpush2.msra.mxu0 0.0
          %906 = vmatprep.subr.mxu0 0.0
          %907 = vmatpush2.msra.mxu0 0.0
          %908 = vmatprep.subr.mxu0 0.0
          %909 = vmatpush2.msra.mxu0 0.0
          %910 = vmatprep.subr.mxu0 0.0
          %911 = vmatpush2.msra.mxu0 0.0
          %912 = vmatprep.subr.mxu0 0.0
          %913 = vmatpush2.msra.mxu0 0.0
          %914 = vmatprep.subr.mxu0 0.0
          %915 = vmatpush2.msra.mxu0 0.0
          %916 = vmatprep.subr.mxu0 0.0
          %917 = vmatpush2.msra.mxu0 0.0
          %918 = vmatprep.subr.mxu0 0.0
          %919 = vmatpush2.msra.mxu0 0.0
          %920 = vmatprep.subr.mxu0 0.0
          %921 = vmatpush2.msra.mxu0 0.0
          %922 = vmatprep.subr.mxu0 0.0
          %923 = vmatpush2.msra.mxu0 0.0
          %924 = vmatprep.subr.mxu0 0.0
          %925 = vmatpush2.msra.mxu0 0.0
          %926 = vmatprep.subr.mxu0 0.0
          %927 = vmatpush2.msra.mxu0 0.0
          %928 = vmatprep.subr.mxu0 0.0
          %929 = vmatpush2.msra.mxu0 0.0
          %930 = vmatprep.subr.mxu0 0.0
          %931 = vmatpush2.msra.mxu0 0.0
          %932 = vmatprep.subr.mxu0 0.0
          %933 = vmatpush2.msra.mxu0 0.0
          %934 = vmatprep.subr.mxu0 0.0
          %935 = vmatpush2.msra.mxu0 0.0
          %936 = vmatprep.mubr.f32.mxu0 0.0
          %937 = vmatmul.mubr.f32.gmra.mxu0 %v824
          %v938 = vpop.f32.mrf.mxu0
          %v939 = vadd.f32 0.0, %v938
          %v940 = vpop.f32.mrf.mxu0
          %941 = vmatprep.mubr.f32.mxu0 0.0
          %942 = vmatmul.mubr.f32.gmra.mxu0 %v825
          %v943 = vpop.f32.mrf.mxu0
          %v944 = vadd.f32 0.0, %v943
          %v945 = vpop.f32.mrf.mxu0
          %946 = vmatprep.mubr.f32.mxu0 0.0
          %947 = vmatmul.mubr.f32.gmra.mxu0 %v826
          %v948 = vpop.f32.mrf.mxu0
          %v949 = vadd.f32 0.0, %v948
          %v950 = vpop.f32.mrf.mxu0
          %951 = vmatprep.mubr.f32.mxu0 0.0
          %952 = vmatmul.mubr.f32.gmra.mxu0 %v827
          %v953 = vpop.f32.mrf.mxu0
          %v954 = vadd.f32 0.0, %v953
          %v955 = vpop.f32.mrf.mxu0
          %956 = vmatprep.mubr.f32.mxu0 0.0
          %957 = vmatmul.mubr.f32.gmra.mxu0 %v828
          %v958 = vpop.f32.mrf.mxu0
          %v959 = vadd.f32 0.0, %v958
          %v960 = vpop.f32.mrf.mxu0
          %961 = vmatprep.mubr.f32.mxu0 0.0
          %962 = vmatmul.mubr.f32.gmra.mxu0 %v829
          %v963 = vpop.f32.mrf.mxu0
          %v964 = vadd.f32 0.0, %v963
          %v965 = vpop.f32.mrf.mxu0
          %966 = vmatprep.mubr.f32.mxu0 0.0
          %967 = vmatmul.mubr.f32.gmra.mxu0 %v830
          %v968 = vpop.f32.mrf.mxu0
          %v969 = vadd.f32 0.0, %v968
          %v970 = vpop.f32.mrf.mxu0
          %971 = vmatprep.mubr.f32.mxu0 0.0
          %972 = vmatmul.mubr.f32.gmra.mxu0 %v831
          %v973 = vpop.f32.mrf.mxu0
          %v974 = vadd.f32 0.0, %v973
          %v975 = vpop.f32.mrf.mxu0
          %976 = vmatprep.mubr.f32.mxu0 0.0
          %977 = vmatmul.mubr.f32.gmra.mxu0 %v832
          %v978 = vpop.f32.mrf.mxu0
          %v979 = vadd.f32 0.0, %v978
          %v980 = vpop.f32.mrf.mxu0
          %981 = vmatprep.mubr.f32.mxu0 0.0
          %982 = vmatmul.mubr.f32.gmra.mxu0 %v833
          %v983 = vpop.f32.mrf.mxu0
          %v984 = vadd.f32 0.0, %v983
          %v985 = vpop.f32.mrf.mxu0
          %986 = vmatprep.mubr.f32.mxu0 0.0
          %987 = vmatmul.mubr.f32.gmra.mxu0 %v834
          %v988 = vpop.f32.mrf.mxu0
          %v989 = vadd.f32 0.0, %v988
          %v990 = vpop.f32.mrf.mxu0
          %991 = vmatprep.mubr.f32.mxu0 0.0
          %992 = vmatmul.mubr.f32.gmra.mxu0 %v835
          %v993 = vpop.f32.mrf.mxu0
          %v994 = vadd.f32 0.0, %v993
          %v995 = vpop.f32.mrf.mxu0
          %996 = vmatprep.mubr.f32.mxu0 0.0
          %997 = vmatmul.mubr.f32.gmra.mxu0 %v836
          %v998 = vpop.f32.mrf.mxu0
          %v999 = vadd.f32 0.0, %v998
          %v1000 = vpop.f32.mrf.mxu0
          %1001 = vmatprep.mubr.f32.mxu0 0.0
          %1002 = vmatmul.mubr.f32.gmra.mxu0 %v837
          %v1003 = vpop.f32.mrf.mxu0
          %v1004 = vadd.f32 0.0, %v1003
          %v1005 = vpop.f32.mrf.mxu0
          %1006 = vmatprep.mubr.f32.mxu0 0.0
          %1007 = vmatmul.mubr.f32.gmra.mxu0 %v838
          %v1008 = vpop.f32.mrf.mxu0
          %v1009 = vadd.f32 0.0, %v1008
          %v1010 = vpop.f32.mrf.mxu0
          %1011 = vmatprep.mubr.f32.mxu0 0.0
          %1012 = vmatmul.mubr.f32.gmra.mxu0 %v839
          %v1013 = vpop.f32.mrf.mxu0
          %v1014 = vadd.f32 0.0, %v1013
          %v1015 = vpop.f32.mrf.mxu0
          %1016 = vdwg.mxu0
          %v1017 = vld [vmem:[%s435] sm:$0xff]
          %v1018 = vld [vmem:[%s435 + $0x8] sm:$0xff]
          %v1019 = vld [vmem:[%s435 + $0x10] sm:$0xff]
          %v1020 = vld [vmem:[%s435 + $0x18] sm:$0xff]
          %v1021 = vld [vmem:[%s435 + $0x20] sm:$0xff]
          %v1022 = vld [vmem:[%s435 + $0x28] sm:$0xff]
          %v1023 = vld [vmem:[%s435 + $0x30] sm:$0xff]
          %v1024 = vld [vmem:[%s435 + $0x38] sm:$0xff]
          %v1025 = vld [vmem:[%s435 + $0x40] sm:$0xff]
          %v1026 = vld [vmem:[%s435 + $0x48] sm:$0xff]
          %v1027 = vld [vmem:[%s435 + $0x50] sm:$0xff]
          %v1028 = vld [vmem:[%s435 + $0x58] sm:$0xff]
          %v1029 = vld [vmem:[%s435 + $0x60] sm:$0xff]
          %v1030 = vld [vmem:[%s435 + $0x68] sm:$0xff]
          %v1031 = vld [vmem:[%s435 + $0x70] sm:$0xff]
          %v1032 = vld [vmem:[%s435 + $0x78] sm:$0xff]
          %1034 = vset.pattern.permute.xlu0 0
          %1035 = vperm.xlu0 %1034, %v1017
          %v1036 = vpop.permute.xlu0 %1035
          %1039 = vset.pattern.permute.xlu0 0
          %1040 = vperm.xlu0 %1039, %v1018
          %v1041 = vpop.permute.xlu0 %1040
          %1044 = vset.pattern.permute.xlu0 0
          %1045 = vperm.xlu0 %1044, %v1019
          %v1046 = vpop.permute.xlu0 %1045
          %1049 = vset.pattern.permute.xlu0 0
          %1050 = vperm.xlu0 %1049, %v1020
          %v1051 = vpop.permute.xlu0 %1050
          %1054 = vset.pattern.permute.xlu0 0
          %1055 = vperm.xlu0 %1054, %v1021
          %v1056 = vpop.permute.xlu0 %1055
          %1059 = vset.pattern.permute.xlu0 0
          %1060 = vperm.xlu0 %1059, %v1022
          %v1061 = vpop.permute.xlu0 %1060
          %1064 = vset.pattern.permute.xlu0 0
          %1065 = vperm.xlu0 %1064, %v1023
          %v1066 = vpop.permute.xlu0 %1065
          %1069 = vset.pattern.permute.xlu0 0
          %1070 = vperm.xlu0 %1069, %v1024
          %v1071 = vpop.permute.xlu0 %1070
          %1074 = vset.pattern.permute.xlu0 0
          %1075 = vperm.xlu0 %1074, %v1025
          %v1076 = vpop.permute.xlu0 %1075
          %1079 = vset.pattern.permute.xlu0 0
          %1080 = vperm.xlu0 %1079, %v1026
          %v1081 = vpop.permute.xlu0 %1080
          %1084 = vset.pattern.permute.xlu0 0
          %1085 = vperm.xlu0 %1084, %v1027
          %v1086 = vpop.permute.xlu0 %1085
          %1089 = vset.pattern.permute.xlu0 0
          %1090 = vperm.xlu0 %1089, %v1028
          %v1091 = vpop.permute.xlu0 %1090
          %1094 = vset.pattern.permute.xlu0 0
          %1095 = vperm.xlu0 %1094, %v1029
          %v1096 = vpop.permute.xlu0 %1095
          %1099 = vset.pattern.permute.xlu0 0
          %1100 = vperm.xlu0 %1099, %v1030
          %v1101 = vpop.permute.xlu0 %1100
          %1104 = vset.pattern.permute.xlu0 0
          %1105 = vperm.xlu0 %1104, %v1031
          %v1106 = vpop.permute.xlu0 %1105
          %1109 = vset.pattern.permute.xlu0 0
          %1110 = vperm.xlu0 %1109, %v1032
          %v1111 = vpop.permute.xlu0 %1110
          %v1113 = vmul.f32 %v939, %v1036
          %v1114 = vmul.f32 %v944, %v1041
          %v1115 = vmul.f32 %v949, %v1046
          %v1116 = vmul.f32 %v954, %v1051
          %v1117 = vmul.f32 %v959, %v1056
          %v1118 = vmul.f32 %v964, %v1061
          %v1119 = vmul.f32 %v969, %v1066
          %v1120 = vmul.f32 %v974, %v1071
          %v1121 = vmul.f32 %v979, %v1076
          %v1122 = vmul.f32 %v984, %v1081
          %v1123 = vmul.f32 %v989, %v1086
          %v1124 = vmul.f32 %v994, %v1091
          %v1125 = vmul.f32 %v999, %v1096
          %v1126 = vmul.f32 %v1004, %v1101
          %v1127 = vmul.f32 %v1009, %v1106
          %v1128 = vmul.f32 %v1014, %v1111
          %v1129 = vld [vmem:[%s5] sm:$0x1]
          %v1131 = vlaneseq
          %v1132 = vshrl.u32 %v1131, 7
          %v1133 = vsub.s32 0, %v1132
          %v1134 = vrot.slane %v1129, %v1133
          %v1136 = vadd.f32 %v1113, %v1134
          %v1137 = vadd.f32 %v1114, %v1134
          %v1138 = vadd.f32 %v1115, %v1134
          %v1139 = vadd.f32 %v1116, %v1134
          %v1140 = vadd.f32 %v1117, %v1134
          %v1141 = vadd.f32 %v1118, %v1134
          %v1142 = vadd.f32 %v1119, %v1134
          %v1143 = vadd.f32 %v1120, %v1134
          %v1144 = vadd.f32 %v1121, %v1134
          %v1145 = vadd.f32 %v1122, %v1134
          %v1146 = vadd.f32 %v1123, %v1134
          %v1147 = vadd.f32 %v1124, %v1134
          %v1148 = vadd.f32 %v1125, %v1134
          %v1149 = vadd.f32 %v1126, %v1134
          %v1150 = vadd.f32 %v1127, %v1134
          %v1151 = vadd.f32 %v1128, %v1134
          %v1152 = vmax.f32 %v1136, 0.0
          %v1153 = vmax.f32 %v1137, 0.0
          %v1154 = vmax.f32 %v1138, 0.0
          %v1155 = vmax.f32 %v1139, 0.0
          %v1156 = vmax.f32 %v1140, 0.0
          %v1157 = vmax.f32 %v1141, 0.0
          %v1158 = vmax.f32 %v1142, 0.0
          %v1159 = vmax.f32 %v1143, 0.0
          %v1160 = vmax.f32 %v1144, 0.0
          %v1161 = vmax.f32 %v1145, 0.0
          %v1162 = vmax.f32 %v1146, 0.0
          %v1163 = vmax.f32 %v1147, 0.0
          %v1164 = vmax.f32 %v1148, 0.0
          %v1165 = vmax.f32 %v1149, 0.0
          %v1166 = vmax.f32 %v1150, 0.0
          %v1167 = vmax.f32 %v1151, 0.0
          %v1168 = vpack.c.bf16 %v1153, %v1152
          %v1169 = vpack.c.bf16 %v1155, %v1154
          %v1170 = vpack.c.bf16 %v1157, %v1156
          %v1171 = vpack.c.bf16 %v1159, %v1158
          %v1172 = vpack.c.bf16 %v1161, %v1160
          %v1173 = vpack.c.bf16 %v1163, %v1162
          %v1174 = vpack.c.bf16 %v1165, %v1164
          %v1175 = vpack.c.bf16 %v1167, %v1166
          %v1184 = vunpack.c.l.b16 %v1168
          %v1185 = vunpack.c.h.b16 %v1168
          %v1186 = vunpack.c.l.b16 %v1169
          %v1187 = vunpack.c.h.b16 %v1169
          %v1188 = vunpack.c.l.b16 %v1170
          %v1189 = vunpack.c.h.b16 %v1170
          %v1190 = vunpack.c.l.b16 %v1171
          %v1191 = vunpack.c.h.b16 %v1171
          %v1192 = vunpack.c.l.b16 %v1172
          %v1193 = vunpack.c.h.b16 %v1172
          %v1194 = vunpack.c.l.b16 %v1173
          %v1195 = vunpack.c.h.b16 %v1173
          %v1196 = vunpack.c.l.b16 %v1174
          %v1197 = vunpack.c.h.b16 %v1174
          %v1198 = vunpack.c.l.b16 %v1175
          %v1199 = vunpack.c.h.b16 %v1175
          %v1200 = vpack.c.b16 %v1184, %v1184
          %v1201 = vpack.c.b16 %v1185, %v1185
          %v1202 = vpack.c.b16 %v1186, %v1186
          %v1203 = vpack.c.b16 %v1187, %v1187
          %v1204 = vpack.c.b16 %v1188, %v1188
          %v1205 = vpack.c.b16 %v1189, %v1189
          %v1206 = vpack.c.b16 %v1190, %v1190
          %v1207 = vpack.c.b16 %v1191, %v1191
          %v1208 = vpack.c.b16 %v1192, %v1192
          %v1209 = vpack.c.b16 %v1193, %v1193
          %v1210 = vpack.c.b16 %v1194, %v1194
          %v1211 = vpack.c.b16 %v1195, %v1195
          %v1212 = vpack.c.b16 %v1196, %v1196
          %v1213 = vpack.c.b16 %v1197, %v1197
          %v1214 = vpack.c.b16 %v1198, %v1198
          %v1215 = vpack.c.b16 %v1199, %v1199
          %1232 = vst [vmem:[%s417] sm:$0xf] %v1200
          %1233 = vst [vmem:[%s417 + $0x4] sm:$0xf] %v1201
          %1234 = vst [vmem:[%s417 + $0x8] sm:$0xf] %v1202
          %1235 = vst [vmem:[%s417 + $0xc] sm:$0xf] %v1203
          %1236 = vst [vmem:[%s417 + $0x10] sm:$0xf] %v1204
          %1237 = vst [vmem:[%s417 + $0x14] sm:$0xf] %v1205
          %1238 = vst [vmem:[%s417 + $0x18] sm:$0xf] %v1206
          %1239 = vst [vmem:[%s417 + $0x1c] sm:$0xf] %v1207
          %1240 = vst [vmem:[%s417 + $0x20] sm:$0xf] %v1208
          %1241 = vst [vmem:[%s417 + $0x24] sm:$0xf] %v1209
          %1242 = vst [vmem:[%s417 + $0x28] sm:$0xf] %v1210
          %1243 = vst [vmem:[%s417 + $0x2c] sm:$0xf] %v1211
          %1244 = vst [vmem:[%s417 + $0x30] sm:$0xf] %v1212
          %1245 = vst [vmem:[%s417 + $0x34] sm:$0xf] %v1213
          %1246 = vst [vmem:[%s417 + $0x38] sm:$0xf] %v1214
          %1247 = vst [vmem:[%s417 + $0x3c] sm:$0xf] %v1215
        $region93: #{tpu_custom_call.1} parent=80 // pred_fallthru
          _
        %s1248 = sand.u32 %s188, 1
        %s1249 = scalar_lea.sflag [#allocation5], %s1248
        %s1250 = sand.u32 %s188, 1
        %s1251 = smul.addr %s1250, 64
        %s1252 = scalar_lea.vmem [#allocation4], %s1251
        // Predicated region
        $region94: #{tpu_custom_call.1} parent=80 // pred_check
          %p1253 = pneg %p198
        $region95: #{tpu_custom_call.1} parent=80 // pred_check_branch
          %1255 = sbr.rel (%p1253) target = $region97
        $region96: #{tpu_custom_call.1} parent=80 // pred_region
          %s1256 = smul.u32 16, %s24
          %s1258 = ssub.s32 1024, 1024
          %1259 = vsyncadd %s1249, %s1258
          %s1260 = smul.addr %s1256, 64
          %s1261 = scalar_lea.hbm %s6, %s1260
          %s1262 = sshll.u32 %s1252, 4
          %s1263 = int_to_ptr.vmem [resolvable:$true] %s1262
          %1268 = dma.vmem_to_hbm [thread:$0]  %s1263, 1024, %s1261, %s1249, 64, 64, 4
        $region97: #{tpu_custom_call.1} parent=80 // pred_fallthru
          _
      $region81: #{tpu_custom_call.1} parent=5 // pred_fallthru
        _
      %p1269 = scmp.le.s32.totalorder 2, %s15
      // Predicated region
      $region98: #{tpu_custom_call.1} parent=5 // pred_check
        %p1270 = pneg %p1269
      $region99: #{tpu_custom_call.1} parent=5 // pred_check_branch
        %1272 = sbr.rel (%p1270) target = $region101
      $region100: #{tpu_custom_call.1} parent=5 // pred_region
        %s1273 = ssub.s32 %s15, 2
        // Predicated region
        $region102: #{tpu_custom_call.1} parent=100 // pred_check
          %p1274 = pneg %p204
        $region103: #{tpu_custom_call.1} parent=100 // pred_check_branch
          %1276 = sbr.rel (%p1274) target = $region105
        $region104: #{tpu_custom_call.1} parent=100 // pred_region
          %s1277 = sand.u32 %s189, 1
          %s1278 = scalar_lea.sflag [#allocation5], %s1277
          %s1279 = sand.u32 %s189, 1
          %s1280 = smul.addr %s1279, 64
          %s1281 = scalar_lea.vmem [#allocation4], %s1280
          %1282 = dma.done %s1278, 1024
        $region105: #{tpu_custom_call.1} parent=100 // pred_fallthru
          _
      $region101: #{tpu_custom_call.1} parent=5 // pred_fallthru
        _
    $region6: #{tpu_custom_call.1} parent=1 // loop_footer
      %s19 = sadd.s32 1, %s15
    $region7: #{tpu_custom_call.1} parent=1 // loop_footer_branch
      %14 = sbr.rel target = $region3
    $region8: #{tpu_custom_call.1} parent=1 // loop_exit
      _
    %1283 = vsyncpa [#allocation5], 1
    %s1284 = scalar_lea.sflag [#allocation5], 1
    %1285 = vsyncpa %s1284, 1

</llo_original>
